<compile_context>
chip_gen: v7x
topology: tpu7x:2x2x1
jax: 0.10.0
libtpu: 0.0.40
codegen_flags: <defaults>
</compile_context>

<pallas_src>
import functools

import jax
import jax.numpy as jnp
from jax import lax
from jax.experimental import pallas as pl
from jax.experimental.pallas import tpu as pltpu


def _round_up(x, m):
    return ((x + m - 1) // m) * m


@functools.lru_cache(maxsize=1)
def _vmem_capacity_bytes():
    """Physical VMEM of the local TPU (per TensorCore), with a safe fallback."""
    try:
        info = pltpu.get_tpu_info()
        cap = int(getattr(info, "vmem_capacity_bytes", 0))
        if cap > 0:
            return cap
    except Exception:
        pass
    return 64 * 1024 * 1024  # conservative: v7x per-TC VMEM


def _gelu_exact(x):
    # torch.nn.GELU() default = exact erf formulation.
    return 0.5 * x * (1.0 + lax.erf(x * 0.7071067811865476))


# ----------------------------------------------------------------------------
# Kernels
# ----------------------------------------------------------------------------
def _ffn_kernel_resident(x_ref, w1_ref, b1_ref, w2_ref, b2_ref, o_ref):
    # Whole FFN for one row tile; W1/W2/biases are VMEM-resident (constant
    # index_maps -> fetched from HBM once for the entire grid).
    h = jnp.dot(x_ref[...], w1_ref[...], preferred_element_type=jnp.float32)
    h = h + b1_ref[...].astype(jnp.float32)
    h = _gelu_exact(h)
    # Dropout(p=0.0) is the identity.
    y = jnp.dot(h.astype(w2_ref.dtype), w2_ref[...],
                preferred_element_type=jnp.float32)
    o_ref[...] = (y + b2_ref[...].astype(jnp.float32)).astype(o_ref.dtype)


def _ffn_kernel_tiled(x_ref, w1_ref, b1_ref, w2_ref, b2_ref, o_ref, *scratch):
    # Hidden-chunk reduction.  If no scratch is passed (f32 output) we
    # accumulate directly into the resident output block.
    acc_ref = scratch[0] if scratch else o_ref
    j = pl.program_id(1)

    @pl.when(j == 0)
    def _():
        acc_ref[...] = jnp.zeros(acc_ref.shape, acc_ref.dtype)

    h = jnp.dot(x_ref[...], w1_ref[...], preferred_element_type=jnp.float32)
    h = h + b1_ref[...].astype(jnp.float32)
    h = _gelu_exact(h)
    # Dropout(p=0.0) is the identity.
    acc_ref[...] += jnp.dot(h.astype(w2_ref.dtype), w2_ref[...],
                            preferred_element_type=jnp.float32)

    @pl.when(j == pl.num_programs(1) - 1)
    def _():
        o_ref[...] = (acc_ref[...] + b2_ref[...].astype(jnp.float32)).astype(
            o_ref.dtype
        )


# ----------------------------------------------------------------------------
# Tiling heuristics
# ----------------------------------------------------------------------------
def _vmem_bytes_estimate(tm, tk, cin_p, cout_p, x_isz, w_isz, o_isz, use_scratch):
    est = 2 * tm * cin_p * x_isz        # x tile (double buffered)
    est += 2 * cin_p * tk * w_isz       # w1 tile
    est += 2 * 8 * tk * w_isz           # b1 tile (sublane padded)
    est += 2 * tk * cout_p * w_isz      # w2 tile
    est += 2 * 8 * cout_p * w_isz       # b2 tile
    est += 2 * tm * cout_p * o_isz      # out tile
    est += tm * tk * 4                  # fc1 f32 intermediate inside the kernel
    if use_scratch:
        est += tm * cout_p * 4          # f32 accumulator scratch
    return est


def _choose_tiling(M, cin_p, h_p, cout_p, x_isz, w_isz, o_isz, out_is_f32,
                   budget, tile_m, sublane):
    """Returns (tm, tk, resident)."""
    tm = min(_round_up(max(tile_m, sublane), sublane), _round_up(M, sublane))
    while True:
        # Weights fully resident (single hidden chunk, no scratch needed).
        if _vmem_bytes_estimate(tm, h_p, cin_p, cout_p,
                                x_isz, w_isz, o_isz, False) <= budget:
            return tm, h_p, True

        # Tiled hidden axis: largest power-of-two 128-multiple chunk that fits.
        use_scratch = not out_is_f32
        best = None
        cand = 128
        while cand < h_p:
            if _vmem_bytes_estimate(tm, cand, cin_p, cout_p,
                                    x_isz, w_isz, o_isz, use_scratch) <= budget:
                best = cand
            cand *= 2
        if best is not None:
            # Re-balance the chunk size to minimize hidden padding waste.
            n_chunks = -(-h_p // best)
            tk = _round_up(-(-h_p // n_chunks), 128)
            return tm, tk, False

        if tm <= sublane:
            # Nothing fits the budget; fall back and let the compiler cope.
            return tm, min(h_p, 128), False
        tm = max(sublane, _round_up(tm // 2, sublane))


# ----------------------------------------------------------------------------
# Wrapper
# ----------------------------------------------------------------------------
@functools.partial(jax.jit, static_argnames=("tile_m",))
def ffn_pallas(x, w1, b1, w2, b2, tile_m=512):
    """FFN forward.

    x : (..., C_in).  Weights stored as (in, hidden) / (hidden, out), i.e.
    the transpose of torch's nn.Linear weight, so the kernel computes x @ W.
    Returns (..., C_out).
    """
    lead = x.shape[:-1]
    C_in = x.shape[-1]
    C_hidden = w1.shape[1]
    C_out = w2.shape[1]

    M = 1
    for d in lead:
        M *= int(d)
    x2d = x.reshape(M, C_in)

    x_isz = jnp.dtype(x.dtype).itemsize
    w_isz = jnp.dtype(w1.dtype).itemsize
    o_dtype = x.dtype
    o_isz = jnp.dtype(o_dtype).itemsize
    out_is_f32 = (o_dtype == jnp.float32)

    # Lane-dense / MXU-aligned padding (exact: zero pads contribute 0).
    lane = 128
    cin_p = _round_up(C_in, lane)
    cout_p = _round_up(C_out, lane)
    h_p = _round_up(C_hidden, lane)
    sublane = {4: 8, 2: 16, 1: 32}.get(x_isz, 8)

    # Generation-aware VMEM budget (v7x: 64 MiB per TC; v5e/v6e: 128 MiB).
    cap = _vmem_capacity_bytes()
    budget = int(cap * 0.65)

    tm, tk, resident = _choose_tiling(M, cin_p, h_p, cout_p, x_isz, w_isz,
                                      o_isz, out_is_f32, budget, tile_m, sublane)

    # v7x has 2 TensorCores: give the "parallel" row axis >= 2 tiles when the
    # weights are resident (splitting then costs no extra weight HBM traffic).
    if resident and _round_up(M, sublane) <= tm and tm > sublane:
        tm = max(sublane, _round_up(-(-_round_up(M, sublane) // 2), sublane))

    H_final = h_p if resident else _round_up(C_hidden, tk)
    if resident:
        tk = H_final

    # --- Pad operands (done in the wrapper; pre-pad weights in production). ---
    M_pad = _round_up(M, tm)
    if M_pad != M:
        x2d = jnp.pad(x2d, ((0, M_pad - M), (0, 0)))
    if cin_p != C_in:
        x2d = jnp.pad(x2d, ((0, 0), (0, cin_p - C_in)))
        w1 = jnp.pad(w1, ((0, cin_p - C_in), (0, 0)))
    if H_final != C_hidden:
        w1 = jnp.pad(w1, ((0, 0), (0, H_final - C_hidden)))
        b1 = jnp.pad(b1, (0, H_final - C_hidden))
        w2 = jnp.pad(w2, ((0, H_final - C_hidden), (0, 0)))
    if cout_p != C_out:
        w2 = jnp.pad(w2, ((0, 0), (0, cout_p - C_out)))
        b2 = jnp.pad(b2, (0, cout_p - C_out))
    b1_2d = b1.reshape(1, H_final)
    b2_2d = b2.reshape(1, cout_p)

    n_row = M_pad // tm

    if resident:
        grid = (n_row,)
        in_specs = [
            pl.BlockSpec((tm, cin_p), lambda i: (i, 0)),
            pl.BlockSpec((cin_p, H_final), lambda i: (0, 0)),   # resident
            pl.BlockSpec((1, H_final), lambda i: (0, 0)),        # resident
            pl.BlockSpec((H_final, cout_p), lambda i: (0, 0)),   # resident
            pl.BlockSpec((1, cout_p), lambda i: (0, 0)),         # resident
        ]
        out_specs = pl.BlockSpec((tm, cout_p), lambda i: (i, 0))
        scratch_shapes = []
        kernel = _ffn_kernel_resident
        dims = ("parallel",)
        use_scratch = False
    else:
        grid = (n_row, H_final // tk)
        in_specs = [
            pl.BlockSpec((tm, cin_p), lambda i, j: (i, 0)),
            pl.BlockSpec((cin_p, tk), lambda i, j: (0, j)),
            pl.BlockSpec((1, tk), lambda i, j: (0, j)),
            pl.BlockSpec((tk, cout_p), lambda i, j: (j, 0)),
            pl.BlockSpec((1, cout_p), lambda i, j: (0, 0)),
        ]
        out_specs = pl.BlockSpec((tm, cout_p), lambda i, j: (i, 0))
        use_scratch = not out_is_f32
        scratch_shapes = (
            [pltpu.VMEM((tm, cout_p), jnp.float32)] if use_scratch else []
        )
        kernel = _ffn_kernel_tiled
        dims = ("parallel", "arbitrary")

    # VMEM limit: clamped to the chip's physical capacity (v7x-safe).
    vmem_est = _vmem_bytes_estimate(tm, tk, cin_p, cout_p, x_isz, w_isz,
                                    o_isz, use_scratch)
    vmem_limit = int(min(int(cap * 0.8),
                         max(int(vmem_est * 1.3), 32 * 1024 * 1024)))

    # Advisory cost, including the weight re-read multiplier of the tiled path.
    weight_passes = 1 if resident else n_row
    cost = pl.CostEstimate(
        flops=2 * M_pad * cin_p * H_final + 2 * M_pad * H_final * cout_p,
        transcendentals=M_pad * H_final,
        bytes_accessed=(
            M_pad * cin_p * x_isz
            + weight_passes * (cin_p * H_final + H_final * cout_p
                               + H_final + cout_p) * w_isz
            + M_pad * cout_p * o_isz
        ),
    )

    out2d = pl.pallas_call(
        kernel,
        out_shape=jax.ShapeDtypeStruct((M_pad, cout_p), o_dtype),
        grid_spec=pltpu.PrefetchScalarGridSpec(
            num_scalar_prefetch=0,
            grid=grid,
            in_specs=in_specs,
            out_specs=out_specs,
            scratch_shapes=scratch_shapes,
        ),
        compiler_params=pltpu.CompilerParams(
            dimension_semantics=dims,
            vmem_limit_bytes=vmem_limit,
        ),
        cost_estimate=cost,
    )(x2d, w1, b1_2d, w2, b2_2d)

    return out2d[:M, :C_out].reshape(*lead, C_out)


def ffn_reference(x, w1, b1, w2, b2):
    h = jnp.einsum("...c,ch->...h", x, w1, precision=lax.Precision.HIGHEST) + b1
    h = 0.5 * h * (1.0 + lax.erf(h / jnp.sqrt(2.0)))
    y = jnp.einsum("...h,ho->...o", h, w2, precision=lax.Precision.HIGHEST) + b2
    return y


if __name__ == "__main__":
    # Small synthetic shapes consistent with a transformer FFN block.
    B, N = 2, 8
    in_features = 32
    hidden_features = 64
    out_features = in_features  # default: out_features = in_features

    key = jax.random.PRNGKey(0)
    k_x, k_w1, k_b1, k_w2, k_b2 = jax.random.split(key, 5)

    x = jax.random.normal(k_x, (B, N, in_features), dtype=jnp.float32)

    # Deterministic parameter init (uniform, roughly matching nn.Linear scale).
    lim1 = 1.0 / (in_features ** 0.5)
    lim2 = 1.0 / (hidden_features ** 0.5)
    # Stored as (in, out) so the kernel computes x @ W (== x @ W_torch.T).
    w1 = jax.random.uniform(k_w1, (in_features, hidden_features),
                            minval=-lim1, maxval=lim1, dtype=jnp.float32)
    b1 = jax.random.uniform(k_b1, (hidden_features,),
                            minval=-lim1, maxval=lim1, dtype=jnp.float32)
    w2 = jax.random.uniform(k_w2, (hidden_features, out_features),
                            minval=-lim2, maxval=lim2, dtype=jnp.float32)
    b2 = jax.random.uniform(k_b2, (out_features,),
                            minval=-lim2, maxval=lim2, dtype=jnp.float32)

    out = ffn_pallas(x, w1, b1, w2, b2)
    out = jax.block_until_ready(out)

    ref = ffn_reference(x, w1, b1, w2, b2)
    assert out.shape == (B, N, out_features)
    max_err = float(jnp.max(jnp.abs(out - ref)))
    # Tolerance accounts for MXU default-precision passes vs HIGHEST reference.
    assert jnp.allclose(out, ref, atol=1e-2, rtol=1e-2), (
        f"max abs err = {max_err}"
    )

    print("KERNEL_OK")
</pallas_src>

<mosaic_0001>
module attributes {stable_mosaic.version = 11 : i64} {
  func.func @_ffn_kernel_resident(%arg0: i32, %arg1: memref<8x128xf32, #tpu.memory_space<vmem>>, %arg2: memref<128x128xf32, #tpu.memory_space<vmem>>, %arg3: memref<1x128xf32, #tpu.memory_space<vmem>>, %arg4: memref<128x128xf32, #tpu.memory_space<vmem>>, %arg5: memref<1x128xf32, #tpu.memory_space<vmem>>, %arg6: memref<8x128xf32, #tpu.memory_space<vmem>>) attributes {dimension_semantics = [#tpu.dimension_semantics<parallel>], iteration_bounds = array<i64: 2>, scalar_prefetch = 0 : i64, scratch_operands = 0 : i64, tpu.core_type = #tpu.core_type<tc>, window_params = [{transform_indices = @transform_0, window_bounds = array<i64: 8, 128>}, {pipeline_mode = #tpu.pipeline_mode<synchronous>, transform_indices = @transform_1, window_bounds = array<i64: 128, 128>}, {pipeline_mode = #tpu.pipeline_mode<synchronous>, transform_indices = @transform_2, window_bounds = array<i64: 1, 128>}, {pipeline_mode = #tpu.pipeline_mode<synchronous>, transform_indices = @transform_3, window_bounds = array<i64: 128, 128>}, {pipeline_mode = #tpu.pipeline_mode<synchronous>, transform_indices = @transform_4, window_bounds = array<i64: 1, 128>}, {transform_indices = @transform_5, window_bounds = array<i64: 8, 128>}]} {
    %c0 = arith.constant 0 : index
    %c0_0 = arith.constant 0 : index
    %0 = vector.load %arg1[%c0, %c0_0] : memref<8x128xf32, #tpu.memory_space<vmem>>, vector<8x128xf32>
    %c0_1 = arith.constant 0 : index
    %c0_2 = arith.constant 0 : index
    %1 = vector.load %arg2[%c0_1, %c0_2] : memref<128x128xf32, #tpu.memory_space<vmem>>, vector<128x128xf32>
    %cst = arith.constant dense<0.000000e+00> : vector<8x128xf32>
    %2 = tpu.matmul %0, %1, %cst {dimension_numbers = #tpu.dot_dimension_numbers<[1], [0], [0], [1], [0, 0, 1, 1], [], []>} : vector<8x128xf32>, vector<128x128xf32>, vector<8x128xf32> -> vector<8x128xf32>
    %c0_3 = arith.constant 0 : index
    %c0_4 = arith.constant 0 : index
    %3 = vector.load %arg3[%c0_3, %c0_4] : memref<1x128xf32, #tpu.memory_space<vmem>>, vector<1x128xf32>
    %4 = vector.broadcast %3 : vector<1x128xf32> to vector<8x128xf32>
    %5 = arith.addf %2, %4 : vector<8x128xf32>
    %cst_5 = arith.constant 5.000000e-01 : f32
    %6 = vector.broadcast %cst_5 : f32 to vector<8x128xf32>
    %7 = arith.mulf %6, %5 : vector<8x128xf32>
    %cst_6 = arith.constant 0.707106769 : f32
    %8 = vector.broadcast %cst_6 : f32 to vector<8x128xf32>
    %9 = arith.mulf %5, %8 : vector<8x128xf32>
    %10 = math.erf %9 : vector<8x128xf32>
    %cst_7 = arith.constant 1.000000e+00 : f32
    %11 = vector.broadcast %cst_7 : f32 to vector<8x128xf32>
    %12 = arith.addf %11, %10 : vector<8x128xf32>
    %13 = arith.mulf %7, %12 : vector<8x128xf32>
    %c0_8 = arith.constant 0 : index
    %c0_9 = arith.constant 0 : index
    %14 = vector.load %arg4[%c0_8, %c0_9] : memref<128x128xf32, #tpu.memory_space<vmem>>, vector<128x128xf32>
    %cst_10 = arith.constant dense<0.000000e+00> : vector<8x128xf32>
    %15 = tpu.matmul %13, %14, %cst_10 {dimension_numbers = #tpu.dot_dimension_numbers<[1], [0], [0], [1], [0, 0, 1, 1], [], []>} : vector<8x128xf32>, vector<128x128xf32>, vector<8x128xf32> -> vector<8x128xf32>
    %c0_11 = arith.constant 0 : index
    %c0_12 = arith.constant 0 : index
    %16 = vector.load %arg5[%c0_11, %c0_12] : memref<1x128xf32, #tpu.memory_space<vmem>>, vector<1x128xf32>
    %17 = vector.broadcast %16 : vector<1x128xf32> to vector<8x128xf32>
    %18 = arith.addf %15, %17 : vector<8x128xf32>
    %c0_13 = arith.constant 0 : index
    %c0_14 = arith.constant 0 : index
    %19 = vector.load %arg6[%c0_13, %c0_14] : memref<8x128xf32, #tpu.memory_space<vmem>>, vector<8x128xf32>
    tpu.vector_store %arg6[%c0_13, %c0_14], %18 {strides = array<i32>} : memref<8x128xf32, #tpu.memory_space<vmem>>, vector<8x128xf32>,
    return
  }
  func.func @transform_0(%arg0: i32) -> (i32, i32) {
    %c0_i32 = arith.constant 0 : i32
    %c0_i32_0 = arith.constant 0 : i32
    return %arg0, %c0_i32 : i32, i32
  }
  func.func @transform_1(%arg0: i32) -> (i32, i32) {
    %c0_i32 = arith.constant 0 : i32
    %c0_i32_0 = arith.constant 0 : i32
    %c0_i32_1 = arith.constant 0 : i32
    return %c0_i32, %c0_i32_0 : i32, i32
  }
  func.func @transform_2(%arg0: i32) -> (i32, i32) {
    %c0_i32 = arith.constant 0 : i32
    %c0_i32_0 = arith.constant 0 : i32
    %c0_i32_1 = arith.constant 0 : i32
    return %c0_i32, %c0_i32_0 : i32, i32
  }
  func.func @transform_3(%arg0: i32) -> (i32, i32) {
    %c0_i32 = arith.constant 0 : i32
    %c0_i32_0 = arith.constant 0 : i32
    %c0_i32_1 = arith.constant 0 : i32
    return %c0_i32, %c0_i32_0 : i32, i32
  }
  func.func @transform_4(%arg0: i32) -> (i32, i32) {
    %c0_i32 = arith.constant 0 : i32
    %c0_i32_0 = arith.constant 0 : i32
    %c0_i32_1 = arith.constant 0 : i32
    return %c0_i32, %c0_i32_0 : i32, i32
  }
  func.func @transform_5(%arg0: i32) -> (i32, i32) {
    %c0_i32 = arith.constant 0 : i32
    %c0_i32_0 = arith.constant 0 : i32
    return %arg0, %c0_i32 : i32, i32
  }
}

</mosaic_0001>

<llo_original>
// kernel: ffn_pallas.1
$region0: #{ffn_pallas.1}
  #allocation0 [shape = 'u32[]', space=smem, size = 0x4, offset = 0x4, fixed_abs, tag = 'smem constant byte address 0x4 - core index']
  #allocation1 [shape = 'u32[144,128]{1,0:T(1,128)}', space=vmem, size = 0x12000, scoped, tag = 'internal scratch']
  %s0 = inlined_call_operand.vmem [shape: f32[16,128], index: 0, kind: input, shape index: {}]
  %s1 = inlined_call_operand.vmem [shape: f32[128,128], index: 1, kind: input, shape index: {}]
  %s2 = inlined_call_operand.vmem [shape: f32[1,128], index: 2, kind: input, shape index: {}]
  %s3 = inlined_call_operand.vmem [shape: f32[128,128], index: 3, kind: input, shape index: {}]
  %s4 = inlined_call_operand.vmem [shape: f32[1,128], index: 4, kind: input, shape index: {}]
  %s5 = inlined_call_operand.vmem [shape: f32[16,128], index: 5, kind: output, shape index: {}]
  %s6 = sld [smem:[#allocation0]]
  $region53: #{ffn_pallas.1} parent=0
    _
  %s8 = ssub.s32 1, %s6
  %s9 = scalar_select 0, %s8, %s6
  loop: start=0, step=1, limit=4
  $region2: #{ffn_pallas.1} parent=0 // loop_pre_header
    _
  $region3: #{ffn_pallas.1} parent=0 // loop_header
    %s11 = sphi 0, %s15
    %p12 = scmp.ge.s32.totalorder %s11, 4
    %s21 = sphi 0, %s23
    %s24 = sphi 0, %s21
    %s25 = sphi 0, %s24
    %s41 = sphi 0, %s25
    %s45 = sphi 0, %s45
    %s47 = sphi 0, %s45
    %s48 = sphi 0, %s47
    %s62 = sphi 0, %s48
    %s66 = sphi 0, %s66
    %s68 = sphi 0, %s66
    %s69 = sphi 0, %s68
    %s83 = sphi 0, %s69
    %s87 = sphi 0, %s87
    %s89 = sphi 0, %s87
    %s90 = sphi 0, %s89
    %s104 = sphi 0, %s90
    %s108 = sphi 0, %s108
    %s110 = sphi 0, %s108
    %s111 = sphi 0, %s110
    %s125 = sphi 0, %s111
    %s131 = sphi 0, %s133
    %s134 = sphi 0, %s131
    %s135 = sphi 0, %s134
    %s151 = sphi 0, %s135
  $region4: #{ffn_pallas.1} parent=0 // loop_header_branch
    %14 = sbr.rel (%p12) target = $region8
  $region5: #{ffn_pallas.1} parent=0 // loop_body
    %s16 = ssub.s32 %s11, 1
    %s17 = ssub.s32 %s11, 2
    %s18 = sadd.s32 %s11, 1
    %s19 = ssub.s32 %s11, %s18
    %p20 = scmp.eq.s32.totalorder %s19, 0
    %s22 = sadd.s32 %s21, 1
    %s23 = scalar_select %p20, %s21, %s22
    %p26 = pneg %p20
    %p27 = scmp.eq.s32.totalorder %s11, 1
    %p28 = por %p26, %p27
    %p29 = scmp.ne.s32.totalorder %s21, %s24
    %p30 = scmp.eq.s32.totalorder %s11, 0
    %p31 = por %p29, %p30
    %p32 = scmp.ne.s32.totalorder %s21, %s24
    %p33 = scmp.eq.s32.totalorder %s16, 1
    %p34 = por %p32, %p33
    %p35 = scmp.ne.s32.totalorder %s24, %s25
    %p36 = scmp.eq.s32.totalorder %s16, 0
    %p37 = por %p35, %p36
    %p38 = scmp.ne.s32.totalorder %s24, %s25
    %p39 = scmp.eq.s32.totalorder %s17, 1
    %p40 = por %p38, %p39
    %p42 = scmp.ne.s32.totalorder %s25, %s41
    %p43 = scmp.eq.s32.totalorder %s17, 0
    %p44 = por %p42, %p43
    %s46 = sadd.s32 %s45, 1
    %p49 = scmp.eq.s32.totalorder %s11, 1
    %p50 = scmp.ne.s32.totalorder %s45, %s47
    %p51 = scmp.eq.s32.totalorder %s11, 0
    %p52 = por %p50, %p51
    %p53 = scmp.ne.s32.totalorder %s45, %s47
    %p54 = scmp.eq.s32.totalorder %s16, 1
    %p55 = por %p53, %p54
    %p56 = scmp.ne.s32.totalorder %s47, %s48
    %p57 = scmp.eq.s32.totalorder %s16, 0
    %p58 = por %p56, %p57
    %p59 = scmp.ne.s32.totalorder %s47, %s48
    %p60 = scmp.eq.s32.totalorder %s17, 1
    %p61 = por %p59, %p60
    %p63 = scmp.ne.s32.totalorder %s48, %s62
    %p64 = scmp.eq.s32.totalorder %s17, 0
    %p65 = por %p63, %p64
    %s67 = sadd.s32 %s66, 1
    %p70 = scmp.eq.s32.totalorder %s11, 1
    %p71 = scmp.ne.s32.totalorder %s66, %s68
    %p72 = scmp.eq.s32.totalorder %s11, 0
    %p73 = por %p71, %p72
    %p74 = scmp.ne.s32.totalorder %s66, %s68
    %p75 = scmp.eq.s32.totalorder %s16, 1
    %p76 = por %p74, %p75
    %p77 = scmp.ne.s32.totalorder %s68, %s69
    %p78 = scmp.eq.s32.totalorder %s16, 0
    %p79 = por %p77, %p78
    %p80 = scmp.ne.s32.totalorder %s68, %s69
    %p81 = scmp.eq.s32.totalorder %s17, 1
    %p82 = por %p80, %p81
    %p84 = scmp.ne.s32.totalorder %s69, %s83
    %p85 = scmp.eq.s32.totalorder %s17, 0
    %p86 = por %p84, %p85
    %s88 = sadd.s32 %s87, 1
    %p91 = scmp.eq.s32.totalorder %s11, 1
    %p92 = scmp.ne.s32.totalorder %s87, %s89
    %p93 = scmp.eq.s32.totalorder %s11, 0
    %p94 = por %p92, %p93
    %p95 = scmp.ne.s32.totalorder %s87, %s89
    %p96 = scmp.eq.s32.totalorder %s16, 1
    %p97 = por %p95, %p96
    %p98 = scmp.ne.s32.totalorder %s89, %s90
    %p99 = scmp.eq.s32.totalorder %s16, 0
    %p100 = por %p98, %p99
    %p101 = scmp.ne.s32.totalorder %s89, %s90
    %p102 = scmp.eq.s32.totalorder %s17, 1
    %p103 = por %p101, %p102
    %p105 = scmp.ne.s32.totalorder %s90, %s104
    %p106 = scmp.eq.s32.totalorder %s17, 0
    %p107 = por %p105, %p106
    %s109 = sadd.s32 %s108, 1
    %p112 = scmp.eq.s32.totalorder %s11, 1
    %p113 = scmp.ne.s32.totalorder %s108, %s110
    %p114 = scmp.eq.s32.totalorder %s11, 0
    %p115 = por %p113, %p114
    %p116 = scmp.ne.s32.totalorder %s108, %s110
    %p117 = scmp.eq.s32.totalorder %s16, 1
    %p118 = por %p116, %p117
    %p119 = scmp.ne.s32.totalorder %s110, %s111
    %p120 = scmp.eq.s32.totalorder %s16, 0
    %p121 = por %p119, %p120
    %p122 = scmp.ne.s32.totalorder %s110, %s111
    %p123 = scmp.eq.s32.totalorder %s17, 1
    %p124 = por %p122, %p123
    %p126 = scmp.ne.s32.totalorder %s111, %s125
    %p127 = scmp.eq.s32.totalorder %s17, 0
    %p128 = por %p126, %p127
    %s129 = ssub.s32 %s11, %s18
    %p130 = scmp.eq.s32.totalorder %s129, 0
    %s132 = sadd.s32 %s131, 1
    %s133 = scalar_select %p130, %s131, %s132
    %p136 = pneg %p130
    %p137 = scmp.eq.s32.totalorder %s11, 1
    %p138 = por %p136, %p137
    %p139 = scmp.ne.s32.totalorder %s131, %s134
    %p140 = scmp.eq.s32.totalorder %s11, 0
    %p141 = por %p139, %p140
    %p142 = scmp.ne.s32.totalorder %s131, %s134
    %p143 = scmp.eq.s32.totalorder %s16, 1
    %p144 = por %p142, %p143
    %p145 = scmp.ne.s32.totalorder %s134, %s135
    %p146 = scmp.eq.s32.totalorder %s16, 0
    %p147 = por %p145, %p146
    %p148 = scmp.ne.s32.totalorder %s134, %s135
    %p149 = scmp.eq.s32.totalorder %s17, 1
    %p150 = por %p148, %p149
    %p152 = scmp.ne.s32.totalorder %s135, %s151
    %p153 = scmp.eq.s32.totalorder %s17, 0
    %p154 = por %p152, %p153
    %p155 = scmp.le.s32.totalorder 1, %s11
    %p156 = scmp.lt.s32.totalorder %s11, 3
    %p157 = pnand %p155, %p156
    %p158 = pneg %p157
    // Predicated region
    $region9: #{ffn_pallas.1} parent=5 // pred_check
      _
    $region10: #{ffn_pallas.1} parent=5 // pred_check_branch
      %160 = sbr.rel (%p157) target = $region12
    $region11: #{ffn_pallas.1} parent=5 // pred_region
      %s161 = ssub.s32 %s11, 1
      // Predicated region
      $region13: #{ffn_pallas.1} parent=11 // pred_check
        %p162 = pneg %p58
      $region14: #{ffn_pallas.1} parent=11 // pred_check_branch
        %164 = sbr.rel (%p162) target = $region16
      $region15: #{ffn_pallas.1} parent=11 // pred_region
        _
      $region16: #{ffn_pallas.1} parent=11 // pred_fallthru
        _
      // Predicated region
      $region17: #{ffn_pallas.1} parent=11 // pred_check
        %p165 = pneg %p79
      $region18: #{ffn_pallas.1} parent=11 // pred_check_branch
        %167 = sbr.rel (%p165) target = $region20
      $region19: #{ffn_pallas.1} parent=11 // pred_region
        _
      $region20: #{ffn_pallas.1} parent=11 // pred_fallthru
        _
      // Predicated region
      $region21: #{ffn_pallas.1} parent=11 // pred_check
        %p168 = pneg %p100
      $region22: #{ffn_pallas.1} parent=11 // pred_check_branch
        %170 = sbr.rel (%p168) target = $region24
      $region23: #{ffn_pallas.1} parent=11 // pred_region
        _
      $region24: #{ffn_pallas.1} parent=11 // pred_fallthru
        _
      // Predicated region
      $region25: #{ffn_pallas.1} parent=11 // pred_check
        %p171 = pneg %p121
      $region26: #{ffn_pallas.1} parent=11 // pred_check_branch
        %173 = sbr.rel (%p171) target = $region28
      $region27: #{ffn_pallas.1} parent=11 // pred_region
        _
      $region28: #{ffn_pallas.1} parent=11 // pred_fallthru
        _
    $region12: #{ffn_pallas.1} parent=5 // pred_fallthru
      _
    %p174 = scmp.lt.s32.totalorder %s11, 2
    // Predicated region
    $region29: #{ffn_pallas.1} parent=5 // pred_check
      %p175 = pneg %p174
    $region30: #{ffn_pallas.1} parent=5 // pred_check_branch
      %177 = sbr.rel (%p175) target = $region32
    $region31: #{ffn_pallas.1} parent=5 // pred_region
      // Predicated region
      $region33: #{ffn_pallas.1} parent=31 // pred_check
        %p178 = pneg %p31
      $region34: #{ffn_pallas.1} parent=31 // pred_check_branch
        %180 = sbr.rel (%p178) target = $region36
      $region35: #{ffn_pallas.1} parent=31 // pred_region
        %p181 = scmp.lt.s32.totalorder %s11, 1
        %s182 = scalar_select %p181, %s11, 1
        %s183 = smul.addr %s182, 8
        %s184 = scalar_lea.vmem %s0, %s183
      $region36: #{ffn_pallas.1} parent=31 // pred_fallthru
        _
    $region32: #{ffn_pallas.1} parent=5 // pred_fallthru
      _
    %p185 = scmp.le.s32.totalorder 1, %s11
    %p186 = scmp.lt.s32.totalorder %s11, 3
    %p187 = pnand %p185, %p186
    %p188 = pneg %p187
    // Predicated region
    $region37: #{ffn_pallas.1} parent=5 // pred_check
      _
    $region38: #{ffn_pallas.1} parent=5 // pred_check_branch
      %190 = sbr.rel (%p187) target = $region40
    $region39: #{ffn_pallas.1} parent=5 // pred_region
      %s191 = ssub.s32 %s11, 1
      %p192 = scmp.lt.s32.totalorder %s16, 1
      %s193 = scalar_select %p192, %s16, 1
      %s194 = smul.addr %s193, 8
      %s195 = scalar_lea.vmem %s0, %s194
      %p196 = pneg %p37
      %p197 = pneg %p34
      %p198 = pneg %p58
      %p199 = pneg %p55
      %p200 = pneg %p79
      %p201 = pneg %p76
      %p202 = pneg %p100
      %p203 = pneg %p97
      %p204 = pneg %p121
      %p205 = pneg %p118
      %p206 = pneg %p147
      %p207 = pneg %p144
      %p208 = scmp.lt.s32.totalorder %s16, 1
      %s209 = scalar_select %p208, %s16, 1
      %s210 = smul.addr %s209, 8
      %s211 = scalar_lea.vmem %s5, %s210
      %p212 = scmp.lt.s32.totalorder %s16, 1
      %s213 = scalar_select %p212, %s16, 1
      %s214 = smul.addr %s213, 8
      %s215 = scalar_lea.vmem %s0, %s214
      %p216 = scmp.lt.s32.totalorder %s16, 1
      %s217 = scalar_select %p216, %s16, 1
      %s218 = smul.addr %s217, 8
      %s219 = scalar_lea.vmem %s5, %s218
      %v220 = vld [vmem:[%s215] sm:$0xff]
      %v221 = vld [vmem:[%s1] sm:$0xff]
      %v222 = vld [vmem:[%s1 + $0x8] sm:$0xff]
      %v223 = vld [vmem:[%s1 + $0x10] sm:$0xff]
      %v224 = vld [vmem:[%s1 + $0x18] sm:$0xff]
      %v225 = vld [vmem:[%s1 + $0x20] sm:$0xff]
      %v226 = vld [vmem:[%s1 + $0x28] sm:$0xff]
      %v227 = vld [vmem:[%s1 + $0x30] sm:$0xff]
      %v228 = vld [vmem:[%s1 + $0x38] sm:$0xff]
      %v229 = vld [vmem:[%s1 + $0x40] sm:$0xff]
      %v230 = vld [vmem:[%s1 + $0x48] sm:$0xff]
      %v231 = vld [vmem:[%s1 + $0x50] sm:$0xff]
      %v232 = vld [vmem:[%s1 + $0x58] sm:$0xff]
      %v233 = vld [vmem:[%s1 + $0x60] sm:$0xff]
      %v234 = vld [vmem:[%s1 + $0x68] sm:$0xff]
      %v235 = vld [vmem:[%s1 + $0x70] sm:$0xff]
      %v236 = vld [vmem:[%s1 + $0x78] sm:$0xff]
      %v237 = vld [vmem:[%s2] sm:$0x1]
      %v239 = vlaneseq
      %v240 = vshrl.u32 %v239, 7
      %v241 = vsub.s32 0, %v240
      %v242 = vrot.slane %v237, %v241
      %244 = vmatprep.subr.mxu0 0.0
      %245 = vmatpush1.msra.mxu0 %v221
      %246 = vmatprep.subr.mxu0 0.0
      %247 = vmatpush1.msra.mxu0 %v222
      %248 = vmatprep.subr.mxu0 0.0
      %249 = vmatpush1.msra.mxu0 %v223
      %250 = vmatprep.subr.mxu0 0.0
      %251 = vmatpush1.msra.mxu0 %v224
      %252 = vmatprep.subr.mxu0 0.0
      %253 = vmatpush1.msra.mxu0 %v225
      %254 = vmatprep.subr.mxu0 0.0
      %255 = vmatpush1.msra.mxu0 %v226
      %256 = vmatprep.subr.mxu0 0.0
      %257 = vmatpush1.msra.mxu0 %v227
      %258 = vmatprep.subr.mxu0 0.0
      %259 = vmatpush1.msra.mxu0 %v228
      %260 = vmatprep.subr.mxu0 0.0
      %261 = vmatpush1.msra.mxu0 %v229
      %262 = vmatprep.subr.mxu0 0.0
      %263 = vmatpush1.msra.mxu0 %v230
      %264 = vmatprep.subr.mxu0 0.0
      %265 = vmatpush1.msra.mxu0 %v231
      %266 = vmatprep.subr.mxu0 0.0
      %267 = vmatpush1.msra.mxu0 %v232
      %268 = vmatprep.subr.mxu0 0.0
      %269 = vmatpush1.msra.mxu0 %v233
      %270 = vmatprep.subr.mxu0 0.0
      %271 = vmatpush1.msra.mxu0 %v234
      %272 = vmatprep.subr.mxu0 0.0
      %273 = vmatpush1.msra.mxu0 %v235
      %274 = vmatprep.subr.mxu0 0.0
      %275 = vmatpush1.msra.mxu0 %v236
      %276 = vmatprep.subr.mxu0 0.0
      %277 = vmatpush1.msra.mxu0 0.0
      %278 = vmatprep.subr.mxu0 0.0
      %279 = vmatpush1.msra.mxu0 0.0
      %280 = vmatprep.subr.mxu0 0.0
      %281 = vmatpush1.msra.mxu0 0.0
      %282 = vmatprep.subr.mxu0 0.0
      %283 = vmatpush1.msra.mxu0 0.0
      %284 = vmatprep.subr.mxu0 0.0
      %285 = vmatpush1.msra.mxu0 0.0
      %286 = vmatprep.subr.mxu0 0.0
      %287 = vmatpush1.msra.mxu0 0.0
      %288 = vmatprep.subr.mxu0 0.0
      %289 = vmatpush1.msra.mxu0 0.0
      %290 = vmatprep.subr.mxu0 0.0
      %291 = vmatpush1.msra.mxu0 0.0
      %292 = vmatprep.subr.mxu0 0.0
      %293 = vmatpush1.msra.mxu0 0.0
      %294 = vmatprep.subr.mxu0 0.0
      %295 = vmatpush1.msra.mxu0 0.0
      %296 = vmatprep.subr.mxu0 0.0
      %297 = vmatpush1.msra.mxu0 0.0
      %298 = vmatprep.subr.mxu0 0.0
      %299 = vmatpush1.msra.mxu0 0.0
      %300 = vmatprep.subr.mxu0 0.0
      %301 = vmatpush1.msra.mxu0 0.0
      %302 = vmatprep.subr.mxu0 0.0
      %303 = vmatpush1.msra.mxu0 0.0
      %304 = vmatprep.subr.mxu0 0.0
      %305 = vmatpush1.msra.mxu0 0.0
      %306 = vmatprep.subr.mxu0 0.0
      %307 = vmatpush1.msra.mxu0 0.0
      %308 = vmatprep.mubr.f32.mxu0 0.0
      %309 = vmatmul.mubr.f32.gmra.mrb[0].mxu0 %v220
      %v310 = vpop.f32.mrb[0].mxu0
      %v311 = vadd.f32 %v242, %v310
      %v312 = vpop.f32.mrb[0].mxu0
      %313 = vdwg.mxu0
      %v314 = vmul.f32 %v311, 0.5
      %v315 = vmul.f32 %v311, 0.70710677
      %v316 = verf.f32.pop %v315
      %v317 = vadd.f32 %v316, 1.0
      %v318 = vmul.f32 %v314, %v317
      %v319 = vld [vmem:[%s3] sm:$0xff]
      %v320 = vld [vmem:[%s3 + $0x8] sm:$0xff]
      %v321 = vld [vmem:[%s3 + $0x10] sm:$0xff]
      %v322 = vld [vmem:[%s3 + $0x18] sm:$0xff]
      %v323 = vld [vmem:[%s3 + $0x20] sm:$0xff]
      %v324 = vld [vmem:[%s3 + $0x28] sm:$0xff]
      %v325 = vld [vmem:[%s3 + $0x30] sm:$0xff]
      %v326 = vld [vmem:[%s3 + $0x38] sm:$0xff]
      %v327 = vld [vmem:[%s3 + $0x40] sm:$0xff]
      %v328 = vld [vmem:[%s3 + $0x48] sm:$0xff]
      %v329 = vld [vmem:[%s3 + $0x50] sm:$0xff]
      %v330 = vld [vmem:[%s3 + $0x58] sm:$0xff]
      %v331 = vld [vmem:[%s3 + $0x60] sm:$0xff]
      %v332 = vld [vmem:[%s3 + $0x68] sm:$0xff]
      %v333 = vld [vmem:[%s3 + $0x70] sm:$0xff]
      %v334 = vld [vmem:[%s3 + $0x78] sm:$0xff]
      %v335 = vld [vmem:[%s4] sm:$0x1]
      %v337 = vlaneseq
      %v338 = vshrl.u32 %v337, 7
      %v339 = vsub.s32 0, %v338
      %v340 = vrot.slane %v335, %v339
      %342 = vmatprep.subr.mxu0 0.0
      %343 = vmatpush1.msra.mxu0 %v319
      %344 = vmatprep.subr.mxu0 0.0
      %345 = vmatpush1.msra.mxu0 %v320
      %346 = vmatprep.subr.mxu0 0.0
      %347 = vmatpush1.msra.mxu0 %v321
      %348 = vmatprep.subr.mxu0 0.0
      %349 = vmatpush1.msra.mxu0 %v322
      %350 = vmatprep.subr.mxu0 0.0
      %351 = vmatpush1.msra.mxu0 %v323
      %352 = vmatprep.subr.mxu0 0.0
      %353 = vmatpush1.msra.mxu0 %v324
      %354 = vmatprep.subr.mxu0 0.0
      %355 = vmatpush1.msra.mxu0 %v325
      %356 = vmatprep.subr.mxu0 0.0
      %357 = vmatpush1.msra.mxu0 %v326
      %358 = vmatprep.subr.mxu0 0.0
      %359 = vmatpush1.msra.mxu0 %v327
      %360 = vmatprep.subr.mxu0 0.0
      %361 = vmatpush1.msra.mxu0 %v328
      %362 = vmatprep.subr.mxu0 0.0
      %363 = vmatpush1.msra.mxu0 %v329
      %364 = vmatprep.subr.mxu0 0.0
      %365 = vmatpush1.msra.mxu0 %v330
      %366 = vmatprep.subr.mxu0 0.0
      %367 = vmatpush1.msra.mxu0 %v331
      %368 = vmatprep.subr.mxu0 0.0
      %369 = vmatpush1.msra.mxu0 %v332
      %370 = vmatprep.subr.mxu0 0.0
      %371 = vmatpush1.msra.mxu0 %v333
      %372 = vmatprep.subr.mxu0 0.0
      %373 = vmatpush1.msra.mxu0 %v334
      %374 = vmatprep.subr.mxu0 0.0
      %375 = vmatpush1.msra.mxu0 0.0
      %376 = vmatprep.subr.mxu0 0.0
      %377 = vmatpush1.msra.mxu0 0.0
      %378 = vmatprep.subr.mxu0 0.0
      %379 = vmatpush1.msra.mxu0 0.0
      %380 = vmatprep.subr.mxu0 0.0
      %381 = vmatpush1.msra.mxu0 0.0
      %382 = vmatprep.subr.mxu0 0.0
      %383 = vmatpush1.msra.mxu0 0.0
      %384 = vmatprep.subr.mxu0 0.0
      %385 = vmatpush1.msra.mxu0 0.0
      %386 = vmatprep.subr.mxu0 0.0
      %387 = vmatpush1.msra.mxu0 0.0
      %388 = vmatprep.subr.mxu0 0.0
      %389 = vmatpush1.msra.mxu0 0.0
      %390 = vmatprep.subr.mxu0 0.0
      %391 = vmatpush1.msra.mxu0 0.0
      %392 = vmatprep.subr.mxu0 0.0
      %393 = vmatpush1.msra.mxu0 0.0
      %394 = vmatprep.subr.mxu0 0.0
      %395 = vmatpush1.msra.mxu0 0.0
      %396 = vmatprep.subr.mxu0 0.0
      %397 = vmatpush1.msra.mxu0 0.0
      %398 = vmatprep.subr.mxu0 0.0
      %399 = vmatpush1.msra.mxu0 0.0
      %400 = vmatprep.subr.mxu0 0.0
      %401 = vmatpush1.msra.mxu0 0.0
      %402 = vmatprep.subr.mxu0 0.0
      %403 = vmatpush1.msra.mxu0 0.0
      %404 = vmatprep.subr.mxu0 0.0
      %405 = vmatpush1.msra.mxu0 0.0
      %406 = vmatprep.mubr.f32.mxu0 0.0
      %407 = vmatmul.mubr.f32.gmra.mrb[0].mxu0 %v318
      %v408 = vpop.f32.mrb[0].mxu0
      %v409 = vadd.f32 %v340, %v408
      %v410 = vpop.f32.mrb[0].mxu0
      %411 = vdwg.mxu0
      %412 = vst [vmem:[%s219] sm:$0xff] %v409
      %p413 = scmp.lt.s32.totalorder %s16, 1
      %s414 = scalar_select %p413, %s16, 1
      %s415 = smul.addr %s414, 8
      %s416 = scalar_lea.vmem %s5, %s415
      // Predicated region
      $region41: #{ffn_pallas.1} parent=39 // pred_check
        %p417 = pneg %p144
      $region42: #{ffn_pallas.1} parent=39 // pred_check_branch
        %419 = sbr.rel (%p417) target = $region44
      $region43: #{ffn_pallas.1} parent=39 // pred_region
        _
      $region44: #{ffn_pallas.1} parent=39 // pred_fallthru
        _
    $region40: #{ffn_pallas.1} parent=5 // pred_fallthru
      _
    %p420 = scmp.le.s32.totalorder 2, %s11
    // Predicated region
    $region45: #{ffn_pallas.1} parent=5 // pred_check
      %p421 = pneg %p420
    $region46: #{ffn_pallas.1} parent=5 // pred_check_branch
      %423 = sbr.rel (%p421) target = $region48
    $region47: #{ffn_pallas.1} parent=5 // pred_region
      %s424 = ssub.s32 %s11, 2
      // Predicated region
      $region49: #{ffn_pallas.1} parent=47 // pred_check
        %p425 = pneg %p150
      $region50: #{ffn_pallas.1} parent=47 // pred_check_branch
        %427 = sbr.rel (%p425) target = $region52
      $region51: #{ffn_pallas.1} parent=47 // pred_region
        %p428 = scmp.lt.s32.totalorder %s17, 1
        %s429 = scalar_select %p428, %s17, 1
        %s430 = smul.addr %s429, 8
        %s431 = scalar_lea.vmem %s5, %s430
      $region52: #{ffn_pallas.1} parent=47 // pred_fallthru
        _
    $region48: #{ffn_pallas.1} parent=5 // pred_fallthru
      _
  $region6: #{ffn_pallas.1} parent=0 // loop_footer
    %s15 = sadd.s32 1, %s11
  $region7: #{ffn_pallas.1} parent=0 // loop_footer_branch
    %10 = sbr.rel target = $region3
  $region8: #{ffn_pallas.1} parent=0 // loop_exit
    _

</llo_original>
